<compile_context>
chip_gen: v6e
topology: v6e:2x2x1
jax: 0.10.0
libtpu: 0.0.40
codegen_flags: <defaults>
</compile_context>

<pallas_src>
import functools

import jax
import jax.numpy as jnp
from jax.experimental import pallas as pl
from jax.experimental.pallas import tpu as pltpu

LANE = 128


def _round_up(x, m):
    return (x + m - 1) // m * m


def dqn_mlp_kernel(x_ref, w1_ref, b1_ref, w2_ref, b2_ref, w3_ref, b3_ref, o_ref):
    # fc1 + ReLU   (bf16 MXU inputs, f32 accumulate, f32 elementwise)
    h1 = jnp.dot(x_ref[...], w1_ref[...], preferred_element_type=jnp.float32)
    h1 = jnp.maximum(h1 + b1_ref[...], 0.0)
    # fc2 + ReLU
    h2 = jnp.dot(h1.astype(w2_ref.dtype), w2_ref[...],
                 preferred_element_type=jnp.float32)
    h2 = jnp.maximum(h2 + b2_ref[...], 0.0)
    # out (no activation); w3/b3 are zero-padded to a lane-dense 128-col slab,
    # so this store is a full-width, unmasked vst.
    out = jnp.dot(h2.astype(w3_ref.dtype), w3_ref[...],
                  preferred_element_type=jnp.float32)
    o_ref[...] = (out + b3_ref[...]).astype(o_ref.dtype)


@functools.partial(jax.jit, static_argnames=("block_batch",))
def dqn_forward(x, params, *, block_batch=512):
    """x: (B, n_observations) float32. params: dict of f32 weights/biases.

    Weights are stored as (in_features, out_features), so x @ W + b matches
    PyTorch's x @ W.T + b with W of shape (out, in).
    """
    w1, b1 = params["w1"], params["b1"]
    w2, b2 = params["w2"], params["b2"]
    w3, b3 = params["w3"], params["b3"]

    B, n_obs = x.shape
    hidden = w1.shape[1]
    n_actions = w3.shape[1]

    # ---- wrapper-side layout / dtype prep (one-time, cheap) ----------------
    # bf16 matmul inputs for the native MXU path; biases stay f32.
    x_bf = x.astype(jnp.bfloat16)
    w1_bf = w1.astype(jnp.bfloat16)
    w2_bf = w2.astype(jnp.bfloat16)
    # Lane-dense output: pad action dim up to a multiple of 128 lanes.
    n_act_p = _round_up(n_actions, LANE)
    w3_bf = (jnp.zeros((hidden, n_act_p), jnp.bfloat16)
             .at[:, :n_actions].set(w3.astype(jnp.bfloat16)))
    b3_p = jnp.zeros((1, n_act_p), jnp.float32).at[:, :n_actions].set(b3)

    # Batch tiling: TB-row tiles (multiple of 8). Weights get constant
    # index_maps so they are loaded once and stay resident in VMEM.
    B_pad = _round_up(B, 8)
    tb = min(block_batch, B_pad)
    B_pad = _round_up(B_pad, tb)
    if B_pad != B:
        x_bf = jnp.pad(x_bf, ((0, B_pad - B), (0, 0)))

    grid = (B_pad // tb,)

    def resident(shape):
        return pl.BlockSpec(shape, lambda i: tuple(0 for _ in shape))

    out = pl.pallas_call(
        dqn_mlp_kernel,
        out_shape=jax.ShapeDtypeStruct((B_pad, n_act_p), jnp.float32),
        grid_spec=pltpu.PrefetchScalarGridSpec(
            num_scalar_prefetch=0,
            grid=grid,
            in_specs=[
                pl.BlockSpec((tb, n_obs), lambda i: (i, 0)),   # x tiled over batch
                resident(w1_bf.shape), resident(b1.shape),
                resident(w2_bf.shape), resident(b2.shape),
                resident(w3_bf.shape), resident(b3_p.shape),
            ],
            out_specs=pl.BlockSpec((tb, n_act_p), lambda i: (i, 0)),
        ),
        compiler_params=pltpu.CompilerParams(
            # Batch axis is fully independent -> shard grid steps across both
            # TensorCores on v7x; harmless no-op on v5e/v6e.
            dimension_semantics=("parallel",),
        ),
    )(x_bf, w1_bf, b1, w2_bf, b2, w3_bf, b3_p)

    return out[:B, :n_actions]


def init_params(key, n_observations, hidden_size, n_actions):
    """PyTorch nn.Linear default init: U(-1/sqrt(fan_in), 1/sqrt(fan_in))."""
    def linear(key, fan_in, fan_out):
        kw, kb = jax.random.split(key)
        bound = 1.0 / jnp.sqrt(jnp.float32(fan_in))
        w = jax.random.uniform(kw, (fan_in, fan_out), jnp.float32, -bound, bound)
        b = jax.random.uniform(kb, (1, fan_out), jnp.float32, -bound, bound)
        return w, b

    k1, k2, k3 = jax.random.split(key, 3)
    w1, b1 = linear(k1, n_observations, hidden_size)
    w2, b2 = linear(k2, hidden_size, hidden_size)
    w3, b3 = linear(k3, hidden_size, n_actions)
    return {"w1": w1, "b1": b1, "w2": w2, "b2": b2, "w3": w3, "b3": b3}


def reference(x, params):
    """Plain-JAX reference mirroring the kernel's bf16-input / f32-acc math."""
    xb = x.astype(jnp.bfloat16)
    w1 = params["w1"].astype(jnp.bfloat16)
    w2 = params["w2"].astype(jnp.bfloat16)
    w3 = params["w3"].astype(jnp.bfloat16)
    h1 = jnp.maximum(
        jnp.dot(xb, w1, preferred_element_type=jnp.float32) + params["b1"], 0.0)
    h2 = jnp.maximum(
        jnp.dot(h1.astype(jnp.bfloat16), w2,
                preferred_element_type=jnp.float32) + params["b2"], 0.0)
    return (jnp.dot(h2.astype(jnp.bfloat16), w3,
                    preferred_element_type=jnp.float32) + params["b3"])


if __name__ == "__main__":
    key = jax.random.PRNGKey(0)
    k_params, k_x1, k_x2 = jax.random.split(key, 3)

    n_observations = 4   # e.g. CartPole state dim
    hidden_size = 32
    n_actions = 2
    # dropout: declared in the PyTorch module but unused in forward() -> omitted.

    params = init_params(k_params, n_observations, hidden_size, n_actions)

    # Small inference-style batch (grid of a single tile).
    x_small = jax.random.normal(k_x1, (8, n_observations), jnp.float32)
    q_small = dqn_forward(x_small, params)
    jax.block_until_ready(q_small)
    assert q_small.shape == (8, n_actions)
    assert jnp.allclose(q_small, reference(x_small, params), atol=1e-3, rtol=1e-3)

    # Replay-style batch exercising the batch grid + padding path
    # (B=600 -> padded to 768, grid=(3,), TB=256).
    x_big = jax.random.normal(k_x2, (600, n_observations), jnp.float32)
    q_big = dqn_forward(x_big, params, block_batch=256)
    jax.block_until_ready(q_big)
    assert q_big.shape == (600, n_actions)
    assert jnp.allclose(q_big, reference(x_big, params), atol=1e-3, rtol=1e-3)

    print("KERNEL_OK")
</pallas_src>

<mosaic_0001>
module attributes {stable_mosaic.version = 11 : i64} {
  func.func @dqn_mlp_kernel(%arg0: i32, %arg1: memref<8x4xbf16, #tpu.memory_space<vmem>>, %arg2: memref<4x32xbf16, #tpu.memory_space<vmem>>, %arg3: memref<1x32xf32, #tpu.memory_space<vmem>>, %arg4: memref<32x32xbf16, #tpu.memory_space<vmem>>, %arg5: memref<1x32xf32, #tpu.memory_space<vmem>>, %arg6: memref<32x128xbf16, #tpu.memory_space<vmem>>, %arg7: memref<1x128xf32, #tpu.memory_space<vmem>>, %arg8: memref<8x128xf32, #tpu.memory_space<vmem>>) attributes {dimension_semantics = [#tpu.dimension_semantics<parallel>], iteration_bounds = array<i64: 1>, scalar_prefetch = 0 : i64, scratch_operands = 0 : i64, tpu.core_type = #tpu.core_type<tc>, window_params = [{transform_indices = @transform_0, window_bounds = array<i64: 8, 4>}, {pipeline_mode = #tpu.pipeline_mode<synchronous>, transform_indices = @transform_1, window_bounds = array<i64: 4, 32>}, {pipeline_mode = #tpu.pipeline_mode<synchronous>, transform_indices = @transform_2, window_bounds = array<i64: 1, 32>}, {pipeline_mode = #tpu.pipeline_mode<synchronous>, transform_indices = @transform_3, window_bounds = array<i64: 32, 32>}, {pipeline_mode = #tpu.pipeline_mode<synchronous>, transform_indices = @transform_4, window_bounds = array<i64: 1, 32>}, {pipeline_mode = #tpu.pipeline_mode<synchronous>, transform_indices = @transform_5, window_bounds = array<i64: 32, 128>}, {pipeline_mode = #tpu.pipeline_mode<synchronous>, transform_indices = @transform_6, window_bounds = array<i64: 1, 128>}, {transform_indices = @transform_7, window_bounds = array<i64: 8, 128>}]} {
    %c0 = arith.constant 0 : index
    %c0_0 = arith.constant 0 : index
    %0 = vector.load %arg1[%c0, %c0_0] : memref<8x4xbf16, #tpu.memory_space<vmem>>, vector<8x4xbf16>
    %c0_1 = arith.constant 0 : index
    %c0_2 = arith.constant 0 : index
    %1 = vector.load %arg2[%c0_1, %c0_2] : memref<4x32xbf16, #tpu.memory_space<vmem>>, vector<4x32xbf16>
    %cst = arith.constant dense<0.000000e+00> : vector<8x32xf32>
    %2 = tpu.matmul %0, %1, %cst {dimension_numbers = #tpu.dot_dimension_numbers<[1], [0], [0], [1], [0, 0, 1, 1], [], []>} : vector<8x4xbf16>, vector<4x32xbf16>, vector<8x32xf32> -> vector<8x32xf32>
    %c0_3 = arith.constant 0 : index
    %c0_4 = arith.constant 0 : index
    %3 = vector.load %arg3[%c0_3, %c0_4] : memref<1x32xf32, #tpu.memory_space<vmem>>, vector<1x32xf32>
    %4 = vector.broadcast %3 : vector<1x32xf32> to vector<8x32xf32>
    %5 = arith.addf %2, %4 : vector<8x32xf32>
    %cst_5 = arith.constant 0.000000e+00 : f32
    %6 = vector.broadcast %cst_5 : f32 to vector<8x32xf32>
    %7 = arith.maximumf %5, %6 : vector<8x32xf32>
    %8 = arith.truncf %7 : vector<8x32xf32> to vector<8x32xbf16>
    %c0_6 = arith.constant 0 : index
    %c0_7 = arith.constant 0 : index
    %9 = vector.load %arg4[%c0_6, %c0_7] : memref<32x32xbf16, #tpu.memory_space<vmem>>, vector<32x32xbf16>
    %cst_8 = arith.constant dense<0.000000e+00> : vector<8x32xf32>
    %10 = tpu.matmul %8, %9, %cst_8 {dimension_numbers = #tpu.dot_dimension_numbers<[1], [0], [0], [1], [0, 0, 1, 1], [], []>} : vector<8x32xbf16>, vector<32x32xbf16>, vector<8x32xf32> -> vector<8x32xf32>
    %c0_9 = arith.constant 0 : index
    %c0_10 = arith.constant 0 : index
    %11 = vector.load %arg5[%c0_9, %c0_10] : memref<1x32xf32, #tpu.memory_space<vmem>>, vector<1x32xf32>
    %12 = vector.broadcast %11 : vector<1x32xf32> to vector<8x32xf32>
    %13 = arith.addf %10, %12 : vector<8x32xf32>
    %cst_11 = arith.constant 0.000000e+00 : f32
    %14 = vector.broadcast %cst_11 : f32 to vector<8x32xf32>
    %15 = arith.maximumf %13, %14 : vector<8x32xf32>
    %16 = arith.truncf %15 : vector<8x32xf32> to vector<8x32xbf16>
    %c0_12 = arith.constant 0 : index
    %c0_13 = arith.constant 0 : index
    %17 = vector.load %arg6[%c0_12, %c0_13] : memref<32x128xbf16, #tpu.memory_space<vmem>>, vector<32x128xbf16>
    %cst_14 = arith.constant dense<0.000000e+00> : vector<8x128xf32>
    %18 = tpu.matmul %16, %17, %cst_14 {dimension_numbers = #tpu.dot_dimension_numbers<[1], [0], [0], [1], [0, 0, 1, 1], [], []>} : vector<8x32xbf16>, vector<32x128xbf16>, vector<8x128xf32> -> vector<8x128xf32>
    %c0_15 = arith.constant 0 : index
    %c0_16 = arith.constant 0 : index
    %19 = vector.load %arg7[%c0_15, %c0_16] : memref<1x128xf32, #tpu.memory_space<vmem>>, vector<1x128xf32>
    %20 = vector.broadcast %19 : vector<1x128xf32> to vector<8x128xf32>
    %21 = arith.addf %18, %20 : vector<8x128xf32>
    %c0_17 = arith.constant 0 : index
    %c0_18 = arith.constant 0 : index
    %22 = vector.load %arg8[%c0_17, %c0_18] : memref<8x128xf32, #tpu.memory_space<vmem>>, vector<8x128xf32>
    tpu.vector_store %arg8[%c0_17, %c0_18], %21 {strides = array<i32>} : memref<8x128xf32, #tpu.memory_space<vmem>>, vector<8x128xf32>,
    return
  }
  func.func @transform_0(%arg0: i32) -> (i32, i32) {
    %c0_i32 = arith.constant 0 : i32
    %c0_i32_0 = arith.constant 0 : i32
    return %arg0, %c0_i32 : i32, i32
  }
  func.func @transform_1(%arg0: i32) -> (i32, i32) {
    %c0_i32 = arith.constant 0 : i32
    %c0_i32_0 = arith.constant 0 : i32
    %c0_i32_1 = arith.constant 0 : i32
    return %c0_i32, %c0_i32_0 : i32, i32
  }
  func.func @transform_2(%arg0: i32) -> (i32, i32) {
    %c0_i32 = arith.constant 0 : i32
    %c0_i32_0 = arith.constant 0 : i32
    %c0_i32_1 = arith.constant 0 : i32
    return %c0_i32, %c0_i32_0 : i32, i32
  }
  func.func @transform_3(%arg0: i32) -> (i32, i32) {
    %c0_i32 = arith.constant 0 : i32
    %c0_i32_0 = arith.constant 0 : i32
    %c0_i32_1 = arith.constant 0 : i32
    return %c0_i32, %c0_i32_0 : i32, i32
  }
  func.func @transform_4(%arg0: i32) -> (i32, i32) {
    %c0_i32 = arith.constant 0 : i32
    %c0_i32_0 = arith.constant 0 : i32
    %c0_i32_1 = arith.constant 0 : i32
    return %c0_i32, %c0_i32_0 : i32, i32
  }
  func.func @transform_5(%arg0: i32) -> (i32, i32) {
    %c0_i32 = arith.constant 0 : i32
    %c0_i32_0 = arith.constant 0 : i32
    %c0_i32_1 = arith.constant 0 : i32
    return %c0_i32, %c0_i32_0 : i32, i32
  }
  func.func @transform_6(%arg0: i32) -> (i32, i32) {
    %c0_i32 = arith.constant 0 : i32
    %c0_i32_0 = arith.constant 0 : i32
    %c0_i32_1 = arith.constant 0 : i32
    return %c0_i32, %c0_i32_0 : i32, i32
  }
  func.func @transform_7(%arg0: i32) -> (i32, i32) {
    %c0_i32 = arith.constant 0 : i32
    %c0_i32_0 = arith.constant 0 : i32
    return %arg0, %c0_i32 : i32, i32
  }
}

</mosaic_0001>

<llo_original>
// kernel: dqn_forward.1
$region0: #{dqn_forward.1}
  #allocation0 [shape = 'u32[]', space=smem, size = 0x4, offset = 0x4, fixed_abs, tag = 'smem constant byte address 0x4 - core index']
  #allocation1 [shape = 'u32[144,128]{1,0:T(1,128)}', space=vmem, size = 0x12000, scoped, tag = 'internal scratch']
  %s0 = inlined_call_operand.vmem [shape: bf16[8,4], index: 0, kind: input, shape index: {}]
  %s1 = inlined_call_operand.vmem [shape: bf16[4,32], index: 1, kind: input, shape index: {}]
  %s2 = inlined_call_operand.vmem [shape: f32[1,32], index: 2, kind: input, shape index: {}]
  %s3 = inlined_call_operand.vmem [shape: bf16[32,32], index: 3, kind: input, shape index: {}]
  %s4 = inlined_call_operand.vmem [shape: f32[1,32], index: 4, kind: input, shape index: {}]
  %s5 = inlined_call_operand.vmem [shape: bf16[32,128], index: 5, kind: input, shape index: {}]
  %s6 = inlined_call_operand.vmem [shape: f32[1,128], index: 6, kind: input, shape index: {}]
  %s7 = inlined_call_operand.vmem [shape: f32[8,128], index: 7, kind: output, shape index: {}]
  %s8 = sld [smem:[#allocation0]]
  $region38: #{dqn_forward.1} parent=0
    _
  %s10 = ssub.s32 1, %s8
  %s11 = scalar_select 0, %s10, %s8
  // Predicated region
  $region2: #{dqn_forward.1} parent=0 // pred_check
    _
  $region3: #{dqn_forward.1} parent=0 // pred_check_branch
    %13 = sbr.rel (0) target = $region5
  $region4: #{dqn_forward.1} parent=0 // pred_region
    _
  $region5: #{dqn_forward.1} parent=0 // pred_fallthru
    _
  // Predicated region
  $region6: #{dqn_forward.1} parent=0 // pred_check
    _
  $region7: #{dqn_forward.1} parent=0 // pred_check_branch
    %15 = sbr.rel (0) target = $region9
  $region8: #{dqn_forward.1} parent=0 // pred_region
    _
  $region9: #{dqn_forward.1} parent=0 // pred_fallthru
    _
  // Predicated region
  $region10: #{dqn_forward.1} parent=0 // pred_check
    _
  $region11: #{dqn_forward.1} parent=0 // pred_check_branch
    %17 = sbr.rel (0) target = $region13
  $region12: #{dqn_forward.1} parent=0 // pred_region
    _
  $region13: #{dqn_forward.1} parent=0 // pred_fallthru
    _
  // Predicated region
  $region14: #{dqn_forward.1} parent=0 // pred_check
    _
  $region15: #{dqn_forward.1} parent=0 // pred_check_branch
    %19 = sbr.rel (0) target = $region17
  $region16: #{dqn_forward.1} parent=0 // pred_region
    _
  $region17: #{dqn_forward.1} parent=0 // pred_fallthru
    _
  // Predicated region
  $region18: #{dqn_forward.1} parent=0 // pred_check
    _
  $region19: #{dqn_forward.1} parent=0 // pred_check_branch
    %21 = sbr.rel (0) target = $region21
  $region20: #{dqn_forward.1} parent=0 // pred_region
    _
  $region21: #{dqn_forward.1} parent=0 // pred_fallthru
    _
  // Predicated region
  $region22: #{dqn_forward.1} parent=0 // pred_check
    _
  $region23: #{dqn_forward.1} parent=0 // pred_check_branch
    %23 = sbr.rel (0) target = $region25
  $region24: #{dqn_forward.1} parent=0 // pred_region
    _
  $region25: #{dqn_forward.1} parent=0 // pred_fallthru
    _
  // Predicated region
  $region26: #{dqn_forward.1} parent=0 // pred_check
    _
  $region27: #{dqn_forward.1} parent=0 // pred_check_branch
    %25 = sbr.rel (0) target = $region29
  $region28: #{dqn_forward.1} parent=0 // pred_region
    _
  $region29: #{dqn_forward.1} parent=0 // pred_fallthru
    _
  %v27 = vld [vmem:[%s0] sm:$0xf]
  %v28 = vld [vmem:[%s1] sm:$0x3]
  %v29 = vld [vmem:[%s2] sm:$0x1]
  %v31 = vlaneseq
  %v32 = vshrl.u32 %v31, 7
  %v33 = vsub.s32 0, %v32
  %v34 = vrot.slane %v29, %v33
  %vm36 = vcmask 31744
  %v38 = vsel %vm36, %v27, 0
  %vm40 = vcmask 1041408
  %v42 = vsel %vm40, %v28, 0
  %44 = vmatprep.subr.bf16.mxu0 0
  %45 = vmatpush1.bf16.msra.mxu0 0
  %46 = vmatprep.subr.bf16.mxu0 0
  %47 = vmatpush1.bf16.msra.mxu0 0
  %48 = vmatprep.subr.bf16.mxu0 0
  %49 = vmatpush1.bf16.msra.mxu0 0
  %50 = vmatprep.subr.bf16.mxu0 0
  %51 = vmatpush1.bf16.msra.mxu0 0
  %52 = vmatprep.subr.bf16.mxu0 0
  %53 = vmatpush1.bf16.msra.mxu0 0
  %54 = vmatprep.subr.bf16.mxu0 0
  %55 = vmatpush1.bf16.msra.mxu0 0
  %56 = vmatprep.subr.bf16.mxu0 0
  %57 = vmatpush1.bf16.msra.mxu0 0
  %58 = vmatprep.subr.bf16.mxu0 0
  %59 = vmatpush1.bf16.msra.mxu0 %v42
  %60 = vmatprep.subr.bf16.mxu0 0
  %61 = vmatpush2.bf16.msra.mxu0 0
  %62 = vmatprep.subr.bf16.mxu0 0
  %63 = vmatpush2.bf16.msra.mxu0 0
  %64 = vmatprep.subr.bf16.mxu0 0
  %65 = vmatpush2.bf16.msra.mxu0 0
  %66 = vmatprep.subr.bf16.mxu0 0
  %67 = vmatpush2.bf16.msra.mxu0 0
  %68 = vmatprep.subr.bf16.mxu0 0
  %69 = vmatpush2.bf16.msra.mxu0 0
  %70 = vmatprep.subr.bf16.mxu0 0
  %71 = vmatpush2.bf16.msra.mxu0 0
  %72 = vmatprep.subr.bf16.mxu0 0
  %73 = vmatpush2.bf16.msra.mxu0 0
  %74 = vmatprep.subr.bf16.mxu0 0
  %75 = vmatpush2.bf16.msra.mxu0 0
  %76 = vmatprep.mubr.bf16.mxu0 0
  %77 = vmatmul.mubr.bf16.gmra.mxu0 %v38
  %v78 = vpop.f32.mrf.mxu0
  %v79 = vadd.f32 %v34, %v78
  %v80 = vpop.f32.mrf.mxu0
  %v81 = vpop.f32.mrf.mxu0
  %v82 = vpop.f32.mrf.mxu0
  %83 = vdwg.mxu0
  %v84 = vmax.f32 %v79, 0.0
  %v85 = vpack.c.bf16 %v84, %v84
  %v86 = vld [vmem:[%s3] sm:$0xf]
  %v87 = vld [vmem:[%s3 + $0x4] sm:$0xf]
  %v88 = vld [vmem:[%s3 + $0x8] sm:$0xf]
  %v89 = vld [vmem:[%s3 + $0xc] sm:$0xf]
  %v90 = vld [vmem:[%s4] sm:$0x1]
  %v92 = vlaneseq
  %v93 = vshrl.u32 %v92, 7
  %v94 = vsub.s32 0, %v93
  %v95 = vrot.slane %v90, %v94
  %v101 = vunpack.c.l.b16 %v86
  %v102 = vunpack.c.l.b16 %v87
  %v103 = vunpack.c.l.b16 %v88
  %v104 = vunpack.c.l.b16 %v89
  %v105 = vpack.c.b16 %v102, %v101
  %v106 = vpack.c.b16 %v104, %v103
  %vm109 = vcmask 261120
  %v111 = vsel %vm109, %v85, 0
  %113 = vmatprep.subr.bf16.mxu0 0
  %114 = vmatpush1.bf16.msra.mxu0 0
  %115 = vmatprep.subr.bf16.mxu0 0
  %116 = vmatpush1.bf16.msra.mxu0 0
  %117 = vmatprep.subr.bf16.mxu0 0
  %118 = vmatpush1.bf16.msra.mxu0 0
  %119 = vmatprep.subr.bf16.mxu0 0
  %120 = vmatpush1.bf16.msra.mxu0 0
  %121 = vmatprep.subr.bf16.mxu0 0
  %122 = vmatpush1.bf16.msra.mxu0 0
  %123 = vmatprep.subr.bf16.mxu0 0
  %124 = vmatpush1.bf16.msra.mxu0 0
  %125 = vmatprep.subr.bf16.mxu0 0
  %126 = vmatpush1.bf16.msra.mxu0 %v106
  %127 = vmatprep.subr.bf16.mxu0 0
  %128 = vmatpush1.bf16.msra.mxu0 %v105
  %129 = vmatprep.subr.bf16.mxu0 0
  %130 = vmatpush2.bf16.msra.mxu0 0
  %131 = vmatprep.subr.bf16.mxu0 0
  %132 = vmatpush2.bf16.msra.mxu0 0
  %133 = vmatprep.subr.bf16.mxu0 0
  %134 = vmatpush2.bf16.msra.mxu0 0
  %135 = vmatprep.subr.bf16.mxu0 0
  %136 = vmatpush2.bf16.msra.mxu0 0
  %137 = vmatprep.subr.bf16.mxu0 0
  %138 = vmatpush2.bf16.msra.mxu0 0
  %139 = vmatprep.subr.bf16.mxu0 0
  %140 = vmatpush2.bf16.msra.mxu0 0
  %141 = vmatprep.subr.bf16.mxu0 0
  %142 = vmatpush2.bf16.msra.mxu0 0
  %143 = vmatprep.subr.bf16.mxu0 0
  %144 = vmatpush2.bf16.msra.mxu0 0
  %145 = vmatprep.mubr.bf16.mxu0 0
  %146 = vmatmul.mubr.bf16.gmra.mxu0 %v111
  %v147 = vpop.f32.mrf.mxu0
  %v148 = vadd.f32 %v95, %v147
  %v149 = vpop.f32.mrf.mxu0
  %v150 = vpop.f32.mrf.mxu0
  %v151 = vpop.f32.mrf.mxu0
  %152 = vdwg.mxu0
  %v153 = vmax.f32 %v148, 0.0
  %v154 = vpack.c.bf16 %v153, %v153
  %v155 = vld [vmem:[%s5] sm:$0xf]
  %v156 = vld [vmem:[%s5 + $0x4] sm:$0xf]
  %v157 = vld [vmem:[%s5 + $0x8] sm:$0xf]
  %v158 = vld [vmem:[%s5 + $0xc] sm:$0xf]
  %v159 = vld [vmem:[%s6] sm:$0x1]
  %v161 = vlaneseq
  %v162 = vshrl.u32 %v161, 7
  %v163 = vsub.s32 0, %v162
  %v164 = vrot.slane %v159, %v163
  %v170 = vunpack.c.l.b16 %v155
  %v171 = vunpack.c.l.b16 %v156
  %v172 = vunpack.c.l.b16 %v157
  %v173 = vunpack.c.l.b16 %v158
  %v174 = vpack.c.b16 %v171, %v170
  %v175 = vpack.c.b16 %v173, %v172
  %v179 = vsel %vm109, %v154, 0
  %181 = vmatprep.subr.bf16.mxu0 0
  %182 = vmatpush1.bf16.msra.mxu0 0
  %183 = vmatprep.subr.bf16.mxu0 0
  %184 = vmatpush1.bf16.msra.mxu0 0
  %185 = vmatprep.subr.bf16.mxu0 0
  %186 = vmatpush1.bf16.msra.mxu0 0
  %187 = vmatprep.subr.bf16.mxu0 0
  %188 = vmatpush1.bf16.msra.mxu0 0
  %189 = vmatprep.subr.bf16.mxu0 0
  %190 = vmatpush1.bf16.msra.mxu0 0
  %191 = vmatprep.subr.bf16.mxu0 0
  %192 = vmatpush1.bf16.msra.mxu0 0
  %193 = vmatprep.subr.bf16.mxu0 0
  %194 = vmatpush1.bf16.msra.mxu0 %v175
  %195 = vmatprep.subr.bf16.mxu0 0
  %196 = vmatpush1.bf16.msra.mxu0 %v174
  %197 = vmatprep.subr.bf16.mxu0 0
  %198 = vmatpush2.bf16.msra.mxu0 0
  %199 = vmatprep.subr.bf16.mxu0 0
  %200 = vmatpush2.bf16.msra.mxu0 0
  %201 = vmatprep.subr.bf16.mxu0 0
  %202 = vmatpush2.bf16.msra.mxu0 0
  %203 = vmatprep.subr.bf16.mxu0 0
  %204 = vmatpush2.bf16.msra.mxu0 0
  %205 = vmatprep.subr.bf16.mxu0 0
  %206 = vmatpush2.bf16.msra.mxu0 0
  %207 = vmatprep.subr.bf16.mxu0 0
  %208 = vmatpush2.bf16.msra.mxu0 0
  %209 = vmatprep.subr.bf16.mxu0 0
  %210 = vmatpush2.bf16.msra.mxu0 0
  %211 = vmatprep.subr.bf16.mxu0 0
  %212 = vmatpush2.bf16.msra.mxu0 0
  %213 = vmatprep.mubr.bf16.mxu0 0
  %214 = vmatmul.mubr.bf16.gmra.mxu0 %v179
  %v215 = vpop.f32.mrf.mxu0
  %v216 = vadd.f32 %v164, %v215
  %v217 = vpop.f32.mrf.mxu0
  %v218 = vpop.f32.mrf.mxu0
  %v219 = vpop.f32.mrf.mxu0
  %220 = vdwg.mxu0
  %221 = vst [vmem:[%s7] sm:$0xff] %v216
  // Predicated region
  $region30: #{dqn_forward.1} parent=0 // pred_check
    _
  $region31: #{dqn_forward.1} parent=0 // pred_check_branch
    %223 = sbr.rel (0) target = $region33
  $region32: #{dqn_forward.1} parent=0 // pred_region
    _
  $region33: #{dqn_forward.1} parent=0 // pred_fallthru
    _
  // Predicated region
  $region34: #{dqn_forward.1} parent=0 // pred_check
    _
  $region35: #{dqn_forward.1} parent=0 // pred_check_branch
    %225 = sbr.rel (0) target = $region37
  $region36: #{dqn_forward.1} parent=0 // pred_region
    _
  $region37: #{dqn_forward.1} parent=0 // pred_fallthru
    _

</llo_original>
